<compile_context>
chip_gen: v5e
topology: v5e:2x2
jax: 0.10.0
libtpu: 0.0.40
codegen_flags: <defaults>
</compile_context>

<pallas_src>
import functools
import math

import jax
import jax.numpy as jnp
from jax.experimental import pallas as pl
from jax.experimental.pallas import tpu as pltpu


def _rmsnorm_kernel(x_ref, w_ref, o_ref, *, eps):
    # x_ref: (block_rows, dim), w_ref: (1, dim) spliced scale.
    x = x_ref[...].astype(jnp.float32)                 # x.float()
    # TODO(synk): if a v7x bf16 bundle dump shows VALU (vmul/vadd/vcvt)
    # saturation, offload this row reduce to the idle MXU:
    #   ms = jnp.dot(x * x, ones((dim, 1)), preferred_element_type=f32) / dim
    ms = jnp.mean(x * x, axis=-1, keepdims=True)       # mean of squares (f32)
    normed = x * jax.lax.rsqrt(ms + eps)                # x * rsqrt(ms + eps)
    # Match PyTorch exactly: _norm(x.float()).type_as(x) is downcast to the
    # input dtype BEFORE the (1 + weight) multiply (double rounding for
    # bf16/f16 inputs).  No-op for f32 inputs.
    normed = normed.astype(x_ref.dtype)
    scale = 1.0 + w_ref[...].astype(jnp.float32)        # (1 + weight), f32
    o_ref[...] = (normed.astype(jnp.float32) * scale).astype(o_ref.dtype)


def _round_up(v: int, m: int) -> int:
    return ((v + m - 1) // m) * m


def rmsnorm(x, weight, model: int = 0, eps: float = 1e-6,
            block_rows: int | None = None, output_dtype=None):
    """RMSNorm forward matching the PyTorch module semantics.

    x:      (..., dim) input
    weight: (W,) learned scale vector; weight[model*dim:(model+1)*dim] is
            applied as (1 + scale).
    output_dtype: optional override (e.g. x.dtype to keep bf16 outputs and
            halve write traffic); default follows PyTorch promotion.
    """
    orig_shape = x.shape
    dim = orig_shape[-1]
    rows = math.prod(orig_shape[:-1]) if len(orig_shape) > 1 else 1

    # Output dtype follows PyTorch promotion: normed (x.dtype) * (1 + weight).
    out_dtype = jnp.dtype(output_dtype) if output_dtype is not None \
        else jnp.result_type(x.dtype, weight.dtype)

    # --- glue: splice the weight for the requested sub-model (static slice) --
    skip = model * dim
    spliced = weight[skip:skip + dim].reshape(1, dim)

    x2d = x.reshape(rows, dim)

    # --- generation-aware tile sizing ---------------------------------------
    itemsize = jnp.dtype(x.dtype).itemsize
    out_itemsize = jnp.dtype(out_dtype).itemsize
    # Sublane packing minimum: 8 rows for 4-byte, 16 for 2-byte, 32 for 1-byte.
    sublane = max(8, 32 // itemsize)

    try:
        vmem_capacity = int(pltpu.get_tpu_info().vmem_capacity_bytes)
    except Exception:  # non-TPU / query unavailable: assume the small end.
        vmem_capacity = 64 * 2**20

    if block_rows is None:
        # ~6 MiB blocks on 128 MiB-VMEM chips (v5e/v6e), ~3 MiB on 64 MiB
        # (v7x).  Big enough to amortize the ~0.35 us/grid-step overhead and
        # sit near the HBM roofline; small enough that double-buffered
        # in/out + f32 temps stay comfortably under the scoped VMEM limit.
        target_bytes = 6 * 2**20 if vmem_capacity >= 128 * 2**20 else 3 * 2**20
        block_rows = max(sublane, target_bytes // (dim * itemsize))
    # Sublane-align so loads/stores stay unmasked.
    block_rows = _round_up(block_rows, sublane)
    rows_rounded = _round_up(rows, sublane)
    block_rows = min(block_rows, rows_rounded)
    # Guarantee >= 2 grid steps whenever possible so v7x's two TensorCores
    # both get work (negligible cost on single-TC v5e/v6e).
    if rows > sublane:
        half_rows = _round_up((rows + 1) // 2, sublane)
        block_rows = min(block_rows, half_rows)
    assert block_rows % sublane == 0 and block_rows >= sublane

    grid = (pl.cdiv(rows, block_rows),)

    # --- VMEM budget (explicit, generation-safe) -----------------------------
    block_bytes_in = block_rows * dim * itemsize
    block_bytes_out = block_rows * dim * out_itemsize
    f32_bytes = block_rows * dim * 4
    # Double-buffered in/out blocks + ~2 f32-block temporaries (fused
    # elementwise chain) + slack for the weight block / sems / internal scratch.
    vmem_est = 2 * block_bytes_in + 2 * block_bytes_out + 2 * f32_bytes + (1 << 20)
    # Cap well below physical VMEM (headroom for Mosaic internals); keep the
    # floor >= 32 MiB so v5e's 16 MiB default never bites.
    vmem_cap = vmem_capacity - 12 * 2**20
    vmem_limit = int(max(32 * 2**20, min(2 * vmem_est, vmem_cap)))

    # TODO(synk): dims that are not multiples of 128 (e.g. tiny test dims)
    # force masked partial stores; a lane-dense folding (rows folded into the
    # 128-lane axis with a segmented sum-of-squares) would fix that.  Real
    # model dims are 128-multiples, so this is a no-op there.
    # TODO(synk): if an xprof trace shows exposed DMA at grid-step boundaries
    # (most likely v7x), add pipeline_mode=pl.Buffered(3) to the x/out specs
    # and account for the extra buffer in vmem_est.

    out = pl.pallas_call(
        functools.partial(_rmsnorm_kernel, eps=eps),
        out_shape=jax.ShapeDtypeStruct((rows, dim), out_dtype),
        grid_spec=pltpu.PrefetchScalarGridSpec(
            num_scalar_prefetch=0,
            grid=grid,
            in_specs=[
                pl.BlockSpec((block_rows, dim), lambda i: (i, 0)),
                pl.BlockSpec((1, dim), lambda i: (0, 0)),
            ],
            out_specs=pl.BlockSpec((block_rows, dim), lambda i: (i, 0)),
        ),
        compiler_params=pltpu.CompilerParams(
            dimension_semantics=("parallel",),
            vmem_limit_bytes=vmem_limit,
        ),
    )(x2d, spliced)

    return out.reshape(orig_shape[:-1] + (dim,))


def rmsnorm_ref(x, weight, model: int = 0, eps: float = 1e-6):
    """Pure-JAX reference mirroring the PyTorch forward (incl. double rounding)."""
    dim = x.shape[-1]
    xf = x.astype(jnp.float32)
    normed = xf * jax.lax.rsqrt(jnp.mean(xf * xf, axis=-1, keepdims=True) + eps)
    normed = normed.astype(x.dtype)                    # .type_as(x)
    skip = model * dim
    spliced = weight[skip:skip + dim]
    return normed * (1.0 + spliced)


if __name__ == "__main__":
    key = jax.random.PRNGKey(0)
    kx, kw = jax.random.split(key)

    batch, seq, dim = 2, 8, 32
    n_models = 2                      # total weight length = n_models * dim
    x = jax.random.normal(kx, (batch, seq, dim), dtype=jnp.float32)

    # nn.Parameter(torch.zeros(dim)) would make the scale a no-op; use small
    # deterministic values instead so the (1 + weight) scaling is exercised.
    weight = 0.1 * jax.random.normal(kw, (n_models * dim,), dtype=jnp.float32)

    model_idx = 1                     # exercise the weight splicing
    out = rmsnorm(x, weight, model=model_idx)
    out = jax.block_until_ready(out)

    ref = rmsnorm_ref(x, weight, model=model_idx)
    assert out.shape == x.shape and out.dtype == ref.dtype
    assert jnp.allclose(out, ref, atol=1e-5, rtol=1e-5), "f32 mismatch vs reference"

    # Low-precision path: bf16 input, f32 weight (output promotes to f32,
    # matching PyTorch), exercising the intermediate .type_as(x) downcast and
    # the 16-row sublane alignment.
    xb = x.astype(jnp.bfloat16)
    out_b = jax.block_until_ready(rmsnorm(xb, weight, model=model_idx))
    ref_b = rmsnorm_ref(xb, weight, model=model_idx)
    assert out_b.dtype == ref_b.dtype
    assert jnp.allclose(out_b, ref_b, atol=1e-3, rtol=1e-3), "bf16 mismatch vs reference"

    print("KERNEL_OK")
</pallas_src>

<mosaic_0001>
module attributes {stable_mosaic.version = 11 : i64} {
  func.func @_rmsnorm_kernel(%arg0: i32, %arg1: memref<8x32xf32, #tpu.memory_space<vmem>>, %arg2: memref<1x32xf32, #tpu.memory_space<vmem>>, %arg3: memref<8x32xf32, #tpu.memory_space<vmem>>) attributes {dimension_semantics = [#tpu.dimension_semantics<parallel>], iteration_bounds = array<i64: 2>, scalar_prefetch = 0 : i64, scratch_operands = 0 : i64, tpu.core_type = #tpu.core_type<tc>, window_params = [{transform_indices = @transform_0, window_bounds = array<i64: 8, 32>}, {pipeline_mode = #tpu.pipeline_mode<synchronous>, transform_indices = @transform_1, window_bounds = array<i64: 1, 32>}, {transform_indices = @transform_2, window_bounds = array<i64: 8, 32>}]} {
    %c0 = arith.constant 0 : index
    %c0_0 = arith.constant 0 : index
    %0 = vector.load %arg1[%c0, %c0_0] : memref<8x32xf32, #tpu.memory_space<vmem>>, vector<8x32xf32>
    %1 = arith.mulf %0, %0 : vector<8x32xf32>
    %cst = arith.constant dense<0.000000e+00> : vector<8xf32>
    %2 = vector.multi_reduction <add>, %1, %cst [1] : vector<8x32xf32> to vector<8xf32>
    %3 = vector.shape_cast %2 : vector<8xf32> to vector<8x1xf32>
    %cst_1 = arith.constant 3.200000e+01 : f32
    %4 = vector.broadcast %cst_1 : f32 to vector<8x1xf32>
    %5 = arith.divf %3, %4 : vector<8x1xf32>
    %cst_2 = arith.constant 9.99999997E-7 : f32
    %6 = vector.broadcast %cst_2 : f32 to vector<8x1xf32>
    %7 = arith.addf %5, %6 : vector<8x1xf32>
    %8 = math.rsqrt %7 : vector<8x1xf32>
    %9 = vector.broadcast %8 : vector<8x1xf32> to vector<8x32xf32>
    %10 = arith.mulf %0, %9 : vector<8x32xf32>
    %c0_3 = arith.constant 0 : index
    %c0_4 = arith.constant 0 : index
    %11 = vector.load %arg2[%c0_3, %c0_4] : memref<1x32xf32, #tpu.memory_space<vmem>>, vector<1x32xf32>
    %cst_5 = arith.constant 1.000000e+00 : f32
    %12 = vector.broadcast %cst_5 : f32 to vector<1x32xf32>
    %13 = arith.addf %12, %11 : vector<1x32xf32>
    %14 = vector.broadcast %13 : vector<1x32xf32> to vector<8x32xf32>
    %15 = arith.mulf %10, %14 : vector<8x32xf32>
    %c0_6 = arith.constant 0 : index
    %c0_7 = arith.constant 0 : index
    %16 = vector.load %arg3[%c0_6, %c0_7] : memref<8x32xf32, #tpu.memory_space<vmem>>, vector<8x32xf32>
    tpu.vector_store %arg3[%c0_6, %c0_7], %15 {strides = array<i32>} : memref<8x32xf32, #tpu.memory_space<vmem>>, vector<8x32xf32>,
    return
  }
  func.func @transform_0(%arg0: i32) -> (i32, i32) {
    %c0_i32 = arith.constant 0 : i32
    %c0_i32_0 = arith.constant 0 : i32
    return %arg0, %c0_i32 : i32, i32
  }
  func.func @transform_1(%arg0: i32) -> (i32, i32) {
    %c0_i32 = arith.constant 0 : i32
    %c0_i32_0 = arith.constant 0 : i32
    %c0_i32_1 = arith.constant 0 : i32
    return %c0_i32, %c0_i32_0 : i32, i32
  }
  func.func @transform_2(%arg0: i32) -> (i32, i32) {
    %c0_i32 = arith.constant 0 : i32
    %c0_i32_0 = arith.constant 0 : i32
    return %arg0, %c0_i32 : i32, i32
  }
}

</mosaic_0001>

<llo_original>
// kernel: tpu_custom_call.1
$region0: #{tpu_custom_call.1}
  #allocation0 [shape = 'u32[]', space=smem, size = 0x4, offset = 0x4, fixed_abs, tag = 'smem constant byte address 0x4 - core index']
  #allocation1 [shape = 'u32[72,128]{1,0:T(1,128)}', space=vmem, size = 0x9000, scoped, tag = 'internal scratch']
  %s0 = inlined_call_operand.hbm [shape: f32[16,32], index: 0, kind: input, shape index: {}]
  %s1 = inlined_call_operand.hbm [shape: f32[1,32], index: 1, kind: input, shape index: {}]
  %s2 = inlined_call_operand.hbm [shape: f32[16,32], index: 2, kind: output, shape index: {}]
  %s3 = sld [smem:[#allocation0]]
  $region49: #{tpu_custom_call.1} parent=0
    _
  %s5 = ssub.s32 1, %s3
  %s6 = scalar_select 0, %s5, %s3
  $region1: #{tpu_custom_call.1} parent=0
    #allocation2 [shape = 'u8[8192]{0}', space=vmem, size = 0x2000, scoped, tag = 'input window, operand 0']
    #allocation3 [shape = 's32[2]{0}', space=sflag, size = 0x8, scoped, tag = 'scoped memory for tpu_custom_call.1']
    #allocation4 [shape = 's32[2]{0}', space=sflag, size = 0x8, scoped, tag = 'scoped memory for tpu_custom_call.1']
    #allocation5 [shape = 'u8[512]{0}', space=vmem, size = 0x400, scoped, tag = 'input window, operand 1, single buffered']
    #allocation6 [shape = 's32[1]{0}', space=sflag, size = 0x4, scoped, tag = 'scoped memory for tpu_custom_call.1']
    #allocation7 [shape = 'u8[8192]{0}', space=vmem, size = 0x2000, scoped, tag = 'output window, operand 0']
    %7 = vsyncpa [#allocation3], 0
    %s8 = scalar_lea.sflag [#allocation3], 1
    %9 = vsyncpa %s8, 0
    %10 = vsyncpa [#allocation6], 0
    %11 = vsyncpa [#allocation4], 0
    %s12 = scalar_lea.sflag [#allocation4], 1
    %13 = vsyncpa %s12, 0
    loop: start=0, step=1, limit=4
    $region2: #{tpu_custom_call.1} parent=1 // loop_pre_header
      _
    $region3: #{tpu_custom_call.1} parent=1 // loop_header
      %s15 = sphi 0, %s19
      %p16 = scmp.ge.s32.totalorder %s15, 4
      %s25 = sphi 0, %s27
      %s28 = sphi 0, %s25
      %s29 = sphi 0, %s28
      %s45 = sphi 0, %s29
      %s49 = sphi 0, %s49
      %s51 = sphi 0, %s49
      %s52 = sphi 0, %s51
      %s66 = sphi 0, %s52
      %s72 = sphi 0, %s74
      %s75 = sphi 0, %s72
      %s76 = sphi 0, %s75
      %s92 = sphi 0, %s76
    $region4: #{tpu_custom_call.1} parent=1 // loop_header_branch
      %18 = sbr.rel (%p16) target = $region8
    $region5: #{tpu_custom_call.1} parent=1 // loop_body
      %s20 = ssub.s32 %s15, 1
      %s21 = ssub.s32 %s15, 2
      %s22 = sadd.s32 %s15, 1
      %s23 = ssub.s32 %s15, %s22
      %p24 = scmp.eq.s32.totalorder %s23, 0
      %s26 = sadd.s32 %s25, 1
      %s27 = scalar_select %p24, %s25, %s26
      %p30 = pneg %p24
      %p31 = scmp.eq.s32.totalorder %s15, 1
      %p32 = por %p30, %p31
      %p33 = scmp.ne.s32.totalorder %s25, %s28
      %p34 = scmp.eq.s32.totalorder %s15, 0
      %p35 = por %p33, %p34
      %p36 = scmp.ne.s32.totalorder %s25, %s28
      %p37 = scmp.eq.s32.totalorder %s20, 1
      %p38 = por %p36, %p37
      %p39 = scmp.ne.s32.totalorder %s28, %s29
      %p40 = scmp.eq.s32.totalorder %s20, 0
      %p41 = por %p39, %p40
      %p42 = scmp.ne.s32.totalorder %s28, %s29
      %p43 = scmp.eq.s32.totalorder %s21, 1
      %p44 = por %p42, %p43
      %p46 = scmp.ne.s32.totalorder %s29, %s45
      %p47 = scmp.eq.s32.totalorder %s21, 0
      %p48 = por %p46, %p47
      %s50 = sadd.s32 %s49, 1
      %p53 = scmp.eq.s32.totalorder %s15, 1
      %p54 = scmp.ne.s32.totalorder %s49, %s51
      %p55 = scmp.eq.s32.totalorder %s15, 0
      %p56 = por %p54, %p55
      %p57 = scmp.ne.s32.totalorder %s49, %s51
      %p58 = scmp.eq.s32.totalorder %s20, 1
      %p59 = por %p57, %p58
      %p60 = scmp.ne.s32.totalorder %s51, %s52
      %p61 = scmp.eq.s32.totalorder %s20, 0
      %p62 = por %p60, %p61
      %p63 = scmp.ne.s32.totalorder %s51, %s52
      %p64 = scmp.eq.s32.totalorder %s21, 1
      %p65 = por %p63, %p64
      %p67 = scmp.ne.s32.totalorder %s52, %s66
      %p68 = scmp.eq.s32.totalorder %s21, 0
      %p69 = por %p67, %p68
      %s70 = ssub.s32 %s15, %s22
      %p71 = scmp.eq.s32.totalorder %s70, 0
      %s73 = sadd.s32 %s72, 1
      %s74 = scalar_select %p71, %s72, %s73
      %p77 = pneg %p71
      %p78 = scmp.eq.s32.totalorder %s15, 1
      %p79 = por %p77, %p78
      %p80 = scmp.ne.s32.totalorder %s72, %s75
      %p81 = scmp.eq.s32.totalorder %s15, 0
      %p82 = por %p80, %p81
      %p83 = scmp.ne.s32.totalorder %s72, %s75
      %p84 = scmp.eq.s32.totalorder %s20, 1
      %p85 = por %p83, %p84
      %p86 = scmp.ne.s32.totalorder %s75, %s76
      %p87 = scmp.eq.s32.totalorder %s20, 0
      %p88 = por %p86, %p87
      %p89 = scmp.ne.s32.totalorder %s75, %s76
      %p90 = scmp.eq.s32.totalorder %s21, 1
      %p91 = por %p89, %p90
      %p93 = scmp.ne.s32.totalorder %s76, %s92
      %p94 = scmp.eq.s32.totalorder %s21, 0
      %p95 = por %p93, %p94
      %p96 = scmp.le.s32.totalorder 1, %s15
      %p97 = scmp.lt.s32.totalorder %s15, 3
      %p98 = pnand %p96, %p97
      %p99 = pneg %p98
      // Predicated region
      $region9: #{tpu_custom_call.1} parent=5 // pred_check
        _
      $region10: #{tpu_custom_call.1} parent=5 // pred_check_branch
        %101 = sbr.rel (%p98) target = $region12
      $region11: #{tpu_custom_call.1} parent=5 // pred_region
        %s102 = ssub.s32 %s15, 1
        // Predicated region
        $region13: #{tpu_custom_call.1} parent=11 // pred_check
          %p103 = pneg %p62
        $region14: #{tpu_custom_call.1} parent=11 // pred_check_branch
          %105 = sbr.rel (%p103) target = $region16
        $region15: #{tpu_custom_call.1} parent=11 // pred_region
          %107 = vsyncadd [#allocation6], 0
          %s109 = sshll.u32 %s1, 4
          %s110 = int_to_ptr.hbm [resolvable:$true] %s109
          %s111 = sshll.u32 [#allocation5], 4
          %s112 = int_to_ptr.vmem [resolvable:$true] %s111
          %114 = dma.hbm_to_vmem [thread:$0]  %s110, 16, %s112, [#allocation6]
        $region16: #{tpu_custom_call.1} parent=11 // pred_fallthru
          _
      $region12: #{tpu_custom_call.1} parent=5 // pred_fallthru
        _
      %p115 = scmp.lt.s32.totalorder %s15, 2
      // Predicated region
      $region17: #{tpu_custom_call.1} parent=5 // pred_check
        %p116 = pneg %p115
      $region18: #{tpu_custom_call.1} parent=5 // pred_check_branch
        %118 = sbr.rel (%p116) target = $region20
      $region19: #{tpu_custom_call.1} parent=5 // pred_region
        // Predicated region
        $region21: #{tpu_custom_call.1} parent=19 // pred_check
          %p119 = pneg %p35
        $region22: #{tpu_custom_call.1} parent=19 // pred_check_branch
          %121 = sbr.rel (%p119) target = $region24
        $region23: #{tpu_custom_call.1} parent=19 // pred_region
          %s122 = sand.u32 %s25, 1
          %s123 = scalar_lea.sflag [#allocation3], %s122
          %s124 = sand.u32 %s25, 1
          %s125 = smul.addr %s124, 8
          %s126 = scalar_lea.vmem [#allocation2], %s125
          %128 = vsyncadd %s123, 0
          %s129 = smul.addr %s15, 8
          %s130 = scalar_lea.hbm %s0, %s129
          %s132 = sshll.u32 %s130, 4
          %s133 = int_to_ptr.hbm [resolvable:$true] %s132
          %s134 = sshll.u32 %s126, 4
          %s135 = int_to_ptr.vmem [resolvable:$true] %s134
          %137 = dma.hbm_to_vmem [thread:$0]  %s133, 128, %s135, %s123
        $region24: #{tpu_custom_call.1} parent=19 // pred_fallthru
          _
      $region20: #{tpu_custom_call.1} parent=5 // pred_fallthru
        _
      %p138 = scmp.le.s32.totalorder 1, %s15
      %p139 = scmp.lt.s32.totalorder %s15, 3
      %p140 = pnand %p138, %p139
      %p141 = pneg %p140
      // Predicated region
      $region25: #{tpu_custom_call.1} parent=5 // pred_check
        _
      $region26: #{tpu_custom_call.1} parent=5 // pred_check_branch
        %143 = sbr.rel (%p140) target = $region28
      $region27: #{tpu_custom_call.1} parent=5 // pred_region
        %s144 = ssub.s32 %s15, 1
        %s145 = sand.u32 %s28, 1
        %s146 = scalar_lea.sflag [#allocation3], %s145
        %s147 = sand.u32 %s28, 1
        %s148 = smul.addr %s147, 8
        %s149 = scalar_lea.vmem [#allocation2], %s148
        // Predicated region
        $region29: #{tpu_custom_call.1} parent=27 // pred_check
          %p150 = pneg %p41
        $region30: #{tpu_custom_call.1} parent=27 // pred_check_branch
          %152 = sbr.rel (%p150) target = $region32
        $region31: #{tpu_custom_call.1} parent=27 // pred_region
          %154 = dma.done %s146, 128
        $region32: #{tpu_custom_call.1} parent=27 // pred_fallthru
          _
        // Predicated region
        $region33: #{tpu_custom_call.1} parent=27 // pred_check
          %p155 = pneg %p62
        $region34: #{tpu_custom_call.1} parent=27 // pred_check_branch
          %157 = sbr.rel (%p155) target = $region36
        $region35: #{tpu_custom_call.1} parent=27 // pred_region
          %159 = dma.done [#allocation6], 16
        $region36: #{tpu_custom_call.1} parent=27 // pred_fallthru
          _
        %s160 = sand.u32 %s28, 1
        %s161 = scalar_lea.sflag [#allocation3], %s160
        %s162 = sand.u32 %s28, 1
        %s163 = smul.addr %s162, 8
        %s164 = scalar_lea.vmem [#allocation2], %s163
        %p165 = pneg %p41
        %p166 = pneg %p38
        %p167 = pneg %p62
        %p168 = pneg %p59
        %p169 = pneg %p88
        %p170 = pneg %p85
        %s171 = sand.u32 %s75, 1
        %s172 = scalar_lea.sflag [#allocation4], %s171
        %s173 = sand.u32 %s75, 1
        %s174 = smul.addr %s173, 8
        %s175 = scalar_lea.vmem [#allocation7], %s174
        %v176 = vld [vmem:[%s149] sm:$0xff]
        %v177 = vmul.f32 %v176, %v176
        %vm178 = vcmask 261120
        %v179 = vsel %vm178, %v177, 0.0
        %180 = vadd.xlane.f32.xlu0 %v179
        %v181 = vpop.xlane.xlu0 %180
        %v182 = vrcp.pop 32.0
        %v183 = vmul.f32 32.0, %v182
        %v184 = vsub.f32 1.0, %v183
        %v185 = vmul.f32 %v182, %v184
        %v186 = vadd.f32 %v182, %v185
        %vm187 = vweird.f32 %v182
        %v188 = vsel %vm187, %v182, %v186
        %v189 = vmul.f32 %v181, %v188
        %v190 = vadd.f32 %v189, 1e-06
        %v191 = vrsqrt.pop %v190
        %v192 = vmul.f32 %v191, %v190
        %v193 = vmul.f32 %v192, %v191
        %v194 = vmul.f32 0.5, %v193
        %v195 = vsub.f32 1.5, %v194
        %v196 = vmul.f32 %v191, %v195
        %vm197 = vweird.f32 %v190
        %vm198 = vweird.f32 %v191
        %vm199 = vmor %vm197, %vm198
        %v200 = vsel %vm199, %v191, %v196
        %v201 = vmul.f32 %v176, %v200
        %v202 = vld [vmem:[#allocation5] sm:$0x1]
        %v203 = vadd.f32 %v202, 1.0
        %v205 = vperm.slane %v203, 0
        %v207 = vmul.f32 %v201, %v205
        %208 = vst.msk [vmem:[%s175] sm:$0xff] %vm178, %v207
        %s209 = sand.u32 %s75, 1
        %s210 = scalar_lea.sflag [#allocation4], %s209
        %s211 = sand.u32 %s75, 1
        %s212 = smul.addr %s211, 8
        %s213 = scalar_lea.vmem [#allocation7], %s212
        // Predicated region
        $region37: #{tpu_custom_call.1} parent=27 // pred_check
          %p214 = pneg %p85
        $region38: #{tpu_custom_call.1} parent=27 // pred_check_branch
          %216 = sbr.rel (%p214) target = $region40
        $region39: #{tpu_custom_call.1} parent=27 // pred_region
          %218 = vsyncadd %s210, 0
          %s219 = smul.addr %s20, 8
          %s220 = scalar_lea.hbm %s2, %s219
          %s222 = sshll.u32 %s213, 4
          %s223 = int_to_ptr.vmem [resolvable:$true] %s222
          %s224 = sshll.u32 %s220, 4
          %s225 = int_to_ptr.hbm [resolvable:$true] %s224
          %227 = dma.vmem_to_hbm [thread:$0]  %s223, 128, %s225, %s210
        $region40: #{tpu_custom_call.1} parent=27 // pred_fallthru
          _
      $region28: #{tpu_custom_call.1} parent=5 // pred_fallthru
        _
      %p228 = scmp.le.s32.totalorder 2, %s15
      // Predicated region
      $region41: #{tpu_custom_call.1} parent=5 // pred_check
        %p229 = pneg %p228
      $region42: #{tpu_custom_call.1} parent=5 // pred_check_branch
        %231 = sbr.rel (%p229) target = $region44
      $region43: #{tpu_custom_call.1} parent=5 // pred_region
        %s232 = ssub.s32 %s15, 2
        // Predicated region
        $region45: #{tpu_custom_call.1} parent=43 // pred_check
          %p233 = pneg %p91
        $region46: #{tpu_custom_call.1} parent=43 // pred_check_branch
          %235 = sbr.rel (%p233) target = $region48
        $region47: #{tpu_custom_call.1} parent=43 // pred_region
          %s236 = sand.u32 %s76, 1
          %s237 = scalar_lea.sflag [#allocation4], %s236
          %s238 = sand.u32 %s76, 1
          %s239 = smul.addr %s238, 8
          %s240 = scalar_lea.vmem [#allocation7], %s239
          %242 = dma.done %s237, 128
        $region48: #{tpu_custom_call.1} parent=43 // pred_fallthru
          _
      $region44: #{tpu_custom_call.1} parent=5 // pred_fallthru
        _
    $region6: #{tpu_custom_call.1} parent=1 // loop_footer
      %s19 = sadd.s32 1, %s15
    $region7: #{tpu_custom_call.1} parent=1 // loop_footer_branch
      %14 = sbr.rel target = $region3
    $region8: #{tpu_custom_call.1} parent=1 // loop_exit
      _
    %243 = vsyncpa [#allocation3], 1
    %s244 = scalar_lea.sflag [#allocation3], 1
    %245 = vsyncpa %s244, 1
    %246 = vsyncpa [#allocation6], 1
    %247 = vsyncpa [#allocation4], 1
    %s248 = scalar_lea.sflag [#allocation4], 1
    %249 = vsyncpa %s248, 1

</llo_original>
